<compile_context>
chip_gen: v6e
topology: v6e:2x2x1
jax: 0.10.0
libtpu: 0.0.40
codegen_flags: <defaults>
</compile_context>

<pallas_src>
import functools
import math

import jax
import jax.numpy as jnp
from jax import lax
from jax.experimental import pallas as pl
from jax.experimental.pallas import tpu as pltpu


# ---------------------------------------------------------------------------
# Kernel bodies
# ---------------------------------------------------------------------------

def _compute_tile(x_slice, wp1k_ref, bias_ref, wp2_ref, o_ref, *, kh, cout):
    """Folded (depthwise + pointwise#1 + BN) -> ReLU -> pointwise#2 -> channel softmax.

    x_slice(k) must return the (Cin, TW) activation window for depthwise tap k
    (a Ref-view slice, loaded lazily), in the streaming dtype (bf16 or f32).
    """
    # Depthwise (KH,1) taps folded into pointwise #1: KH small MXU matmuls that read
    # shifted lane-windows of the input (bf16 x bf16 -> f32 accumulate).
    h1 = jnp.dot(wp1k_ref[0], x_slice(0), preferred_element_type=jnp.float32)
    for k in range(1, kh):
        h1 = h1 + jnp.dot(wp1k_ref[k], x_slice(k), preferred_element_type=jnp.float32)

    # Folded BN bias + ReLU.
    # TODO(synk): training-mode Dropout(0.1) not implemented (inference => identity).
    h1 = jnp.maximum(h1 + bias_ref[...], 0.0)

    # Pointwise #2 (1x1 depthwise per-channel scale folded into the weights); drop the
    # zero-padded logit rows before the softmax.
    h2 = jnp.dot(wp2_ref[...], h1, preferred_element_type=jnp.float32)[:cout]

    # Softmax over the channel (sublane) axis; the store stays lane-dense.
    m = jnp.max(h2, axis=0, keepdims=True)
    e = jnp.exp(h2 - m)
    s = jnp.sum(e, axis=0, keepdims=True)
    r = pl.reciprocal(s, approx=True)        # EUP slot
    r = r * (2.0 - s * r)                    # one Newton step -> ~f32-accurate 1/s
    o_ref[0] = (e * r).astype(o_ref.dtype)


def _fcn_head_kernel_block(x_ref, wp1k_ref, bias_ref, wp2_ref, o_ref, *, kh, w, tw, cout):
    """T == 1 path: whole-image window delivered by the auto-pipelined BlockSpec."""
    xsrc = x_ref.at[0]                       # (Cin, H*W) Ref view, no bulk load
    _compute_tile(lambda k: xsrc[:, k * w:k * w + tw],
                  wp1k_ref, bias_ref, wp2_ref, o_ref, kh=kh, cout=cout)


def _fcn_head_kernel_dma(x_hbm, wp1k_ref, bias_ref, wp2_ref, o_ref, xbuf, sem, *,
                         kh, w, tw, cout, th_in_w):
    """T > 1 path: haloed input window, manual double-buffered DMA from HBM."""
    n = pl.program_id(0)
    t = pl.program_id(1)
    nt = pl.num_programs(1)

    def copy_for(tt, slot):
        start = pl.multiple_of(tt * tw, 128)            # tw is a static multiple of 128
        return pltpu.make_async_copy(
            x_hbm.at[n, :, pl.ds(start, th_in_w)],      # haloed input window
            xbuf.at[slot], sem.at[slot])

    slot = lax.rem(t, 2)

    # Prime once per image (safe when the batch axis is sharded across TensorCores),
    # then prefetch the next row-tile of the same image while computing this one.
    # TODO(synk): cross-image prefetch would also hide the per-image prime latency but is
    # unsafe under megacore batch sharding (the peer core's first image is never primed).
    @pl.when(t == 0)
    def _():
        copy_for(t, slot).start()

    @pl.when(t + 1 < nt)
    def _():
        copy_for(jnp.minimum(t + 1, nt - 1), 1 - slot).start()

    copy_for(t, slot).wait()

    xsrc = xbuf.at[slot]                    # Ref view; the taps below load windows only
    _compute_tile(lambda k: xsrc[:, k * w:k * w + tw],
                  wp1k_ref, bias_ref, wp2_ref, o_ref, kh=kh, cout=cout)


# ---------------------------------------------------------------------------
# Tiling / wrapper
# ---------------------------------------------------------------------------

def _vmem_capacity_bytes():
    try:
        cap = int(pltpu.get_tpu_info().vmem_capacity_bytes)
        if cap > 0:
            return cap
    except Exception:
        pass
    return 64 << 20          # conservative default (v7x per-TensorCore VMEM)


def _choose_tile_rows(hout, w, cin, c4p, coutp, kh, in_itemsize,
                      max_rows_per_tile, budget_bytes):
    """Largest output-row tile TH such that TH divides Hout, TH*W is a multiple of 128
    (lane-aligned output blocks) and the working set -- double-buffered haloed input
    window, double-buffered output block, live intermediates and resident weights --
    fits the VMEM budget.  Falls back to whole-image windows (T == 1)."""
    quantum = 128 // math.gcd(w, 128)

    def work_bytes(th):
        tw = th * w
        th_in = (th + kh - 1) * w
        return (2 * cin * th_in * in_itemsize                       # input double buffer
                + 2 * coutp * tw * 4                                # output double buffer
                + (cin * in_itemsize + (c4p + 3 * coutp) * 4) * tw  # live intermediates
                + 2 * (kh * c4p * cin * in_itemsize + (c4p + coutp * c4p) * 4))  # weights

    best = None
    th = quantum
    while th <= min(hout, max_rows_per_tile):
        if hout % th == 0 and work_bytes(th) <= budget_bytes:
            best = th
        th += quantum
    # TODO(synk): if Hout has no lane-aligned divisor AND the whole image exceeds the
    # VMEM budget, pad H (or W) on the host; FCN-head shapes always fit in practice.
    return best if best is not None else hout


def fcn_head_separable(x_nchw, wp1_k, bias_f, wp2_f, *, dim_size,
                       max_rows_per_tile=512, input_dtype=jnp.bfloat16):
    """x_nchw: (N, Cin, H, W) f32 -> softmax probabilities (N, Cout, H - dim_size + 1, W) f32.

    wp1_k : (KH, Cin//4, Cin)  depthwise taps x BN scale x pointwise #1 (see fold_params)
    bias_f: (Cin//4, 1)        folded BN bias
    wp2_f : (Cout, Cin//4)     pointwise #2 with the 1x1 depthwise scale folded in
    """
    N, Cin, H, W = x_nchw.shape
    KH = dim_size
    Hout = H - KH + 1
    KH2, C4, Cin2 = wp1_k.shape
    assert KH2 == KH and Cin2 == Cin
    Cout = wp2_f.shape[0]

    # Pad the small channel dims to multiples of 8 so every matmul presents >= 8 sublanes
    # to the MXU.  Padded h1 rows are ReLU(0 + 0) = 0, padded wp2 entries are 0, and the
    # padded logit rows are sliced off inside the kernel before the softmax.
    C4p = max(8, -(-C4 // 8) * 8)
    Coutp = max(8, -(-Cout // 8) * 8)
    wp1_kp = jnp.pad(wp1_k, ((0, 0), (0, C4p - C4), (0, 0))).astype(input_dtype)
    bias_p = jnp.pad(bias_f, ((0, C4p - C4), (0, 0))).astype(jnp.float32)
    wp2_p = jnp.pad(wp2_f, ((0, Coutp - Cout), (0, C4p - C4))).astype(jnp.float32)

    # NCHW -> (N, Cin, H*W): pure reshape, no transpose; stream activations in bf16
    # (f32 MXU accumulation), halving HBM bytes on this memory-bound head.
    x_flat = x_nchw.reshape(N, Cin, H * W).astype(input_dtype)
    isz = jnp.dtype(input_dtype).itemsize

    vmem_cap = _vmem_capacity_bytes()
    vmem_limit = min(int(vmem_cap * 0.8), 100 << 20)    # ~100 MiB v5e/v6e, ~51 MiB v7x
    budget = int(vmem_cap * 0.5)

    TH = _choose_tile_rows(Hout, W, Cin, C4p, Coutp, KH, isz, max_rows_per_tile, budget)
    T = Hout // TH
    tw = TH * W

    out_shape = jax.ShapeDtypeStruct((N, Cout, Hout * W), jnp.float32)

    if T == 1:
        # Whole-image window: plain auto-pipelined BlockSpec (full overlap across batch).
        kernel = functools.partial(_fcn_head_kernel_block, kh=KH, w=W, tw=tw, cout=Cout)
        grid_spec = pltpu.PrefetchScalarGridSpec(
            num_scalar_prefetch=0,
            grid=(N,),
            in_specs=[
                pl.BlockSpec((1, Cin, H * W), lambda n: (n, 0, 0)),
                pl.BlockSpec((KH, C4p, Cin), lambda n: (0, 0, 0)),
                pl.BlockSpec((C4p, 1), lambda n: (0, 0)),
                pl.BlockSpec((Coutp, C4p), lambda n: (0, 0)),
            ],
            out_specs=pl.BlockSpec((1, Cout, Hout * W), lambda n: (n, 0, 0)),
        )
        dim_sem = ("parallel",)
    else:
        # Haloed row-tiles: manual double-buffered DMA from HBM.
        th_in_w = (TH + KH - 1) * W
        kernel = functools.partial(_fcn_head_kernel_dma, kh=KH, w=W, tw=tw, cout=Cout,
                                   th_in_w=th_in_w)
        grid_spec = pltpu.PrefetchScalarGridSpec(
            num_scalar_prefetch=0,
            grid=(N, T),
            in_specs=[
                pl.BlockSpec(memory_space=pl.ANY),               # x: manual halo DMA
                pl.BlockSpec((KH, C4p, Cin), lambda n, t: (0, 0, 0)),
                pl.BlockSpec((C4p, 1), lambda n, t: (0, 0)),
                pl.BlockSpec((Coutp, C4p), lambda n, t: (0, 0)),
            ],
            out_specs=pl.BlockSpec((1, Cout, tw), lambda n, t: (n, 0, t)),
            scratch_shapes=[
                pltpu.VMEM((2, Cin, th_in_w), x_flat.dtype),
                pltpu.SemaphoreType.DMA((2,)),
            ],
        )
        # TODO(synk): on v7x with N == 1, additionally split the row-tile axis into a
        # second "parallel" axis so both TensorCores are busy.
        dim_sem = ("parallel", "arbitrary")

    out_flat = pl.pallas_call(
        kernel,
        out_shape=out_shape,
        grid_spec=grid_spec,
        compiler_params=pltpu.CompilerParams(
            dimension_semantics=dim_sem,
            vmem_limit_bytes=vmem_limit,
        ),
    )(x_flat, wp1_kp, bias_p, wp2_p)

    # (N, Cout, Hout*W) -> NCHW: again a pure reshape.
    return out_flat.reshape(N, Cout, Hout, W)


# ---------------------------------------------------------------------------
# Host-side parameter folding and pure-JAX reference
# ---------------------------------------------------------------------------

def fold_params(dw1_w, pw1_w, gamma, beta, run_mean, run_var, dw2_w, pw2_w, eps=1e-5):
    """Fold (depthwise (KH,1) taps, eval-mode BN) into KH copies of pointwise #1 and the
    1x1 depthwise scale into pointwise #2.  All folding is done in f32 on the host."""
    wd1 = dw1_w[:, 0, :, 0]                                   # (Cin, KH)
    bn_scale = gamma / jnp.sqrt(run_var + eps)                # (C4,)
    wp1 = pw1_w[:, :, 0, 0] * bn_scale[:, None]               # (C4, Cin)
    wp1_k = wp1[None, :, :] * wd1.T[:, None, :]               # (KH, C4, Cin)
    bias_f = (beta - run_mean * bn_scale)[:, None]            # (C4, 1)
    wp2_f = pw2_w[:, :, 0, 0] * dw2_w[:, 0, 0, 0][None, :]    # (Cout, C4)
    return wp1_k, bias_f, wp2_f


def reference_forward(x, dw1_w, pw1_w, gamma, beta, run_mean, run_var,
                      dw2_w, pw2_w, *, dim_size, eps=1e-5):
    """Pure-JAX NCHW reference mirroring the PyTorch module in eval mode (f32)."""
    KH = dim_size
    Hout = x.shape[2] - KH + 1
    hp = jax.lax.Precision.HIGHEST
    dwc = jnp.zeros(x.shape[:2] + (Hout, x.shape[3]), jnp.float32)
    for k in range(KH):
        dwc = dwc + x[:, :, k:k + Hout, :] * dw1_w[:, 0, k, 0][None, :, None, None]
    h1 = jnp.einsum('nchw,oc->nohw', dwc, pw1_w[:, :, 0, 0], precision=hp)
    h1 = (h1 - run_mean[None, :, None, None]) / jnp.sqrt(run_var + eps)[None, :, None, None]
    h1 = h1 * gamma[None, :, None, None] + beta[None, :, None, None]
    h1 = jnp.maximum(h1, 0.0)
    h1 = h1 * dw2_w[:, 0, 0, 0][None, :, None, None]
    h2 = jnp.einsum('nchw,oc->nohw', h1, pw2_w[:, :, 0, 0], precision=hp)
    return jax.nn.softmax(h2, axis=1)


# ---------------------------------------------------------------------------
# Self-test
# ---------------------------------------------------------------------------

def _run_case(case_idx, key, *, N, Cin, H, W, dim_size, Cout, max_rows_per_tile, tol):
    C4 = Cin // 4
    keys = jax.random.split(key, 9)
    x = jax.random.normal(keys[0], (N, Cin, H, W), jnp.float32)
    dw1_w = 0.3 * jax.random.normal(keys[1], (Cin, 1, dim_size, 1), jnp.float32)
    pw1_w = 0.3 * jax.random.normal(keys[2], (C4, Cin, 1, 1), jnp.float32)
    gamma = 1.0 + 0.1 * jax.random.normal(keys[3], (C4,), jnp.float32)
    beta = 0.1 * jax.random.normal(keys[4], (C4,), jnp.float32)
    run_mean = 0.1 * jax.random.normal(keys[5], (C4,), jnp.float32)
    run_var = 1.0 + 0.1 * jnp.abs(jax.random.normal(keys[6], (C4,), jnp.float32))
    dw2_w = 0.3 * jax.random.normal(keys[7], (C4, 1, 1, 1), jnp.float32)
    pw2_w = 0.3 * jax.random.normal(keys[8], (Cout, C4, 1, 1), jnp.float32)

    wp1_k, bias_f, wp2_f = fold_params(dw1_w, pw1_w, gamma, beta,
                                       run_mean, run_var, dw2_w, pw2_w)
    out = fcn_head_separable(x, wp1_k, bias_f, wp2_f, dim_size=dim_size,
                             max_rows_per_tile=max_rows_per_tile)
    out = jax.block_until_ready(out)

    ref = reference_forward(x, dw1_w, pw1_w, gamma, beta, run_mean, run_var,
                            dw2_w, pw2_w, dim_size=dim_size)
    Hout = H - dim_size + 1
    assert out.shape == (N, Cout, Hout, W), (case_idx, out.shape)
    err = float(jnp.max(jnp.abs(out - ref)))
    assert err <= tol, (case_idx, err)
    return err


if __name__ == "__main__":
    root = jax.random.PRNGKey(0)
    k1, k2 = jax.random.split(root)
    # Case 1: tiny channels, Hout=13 has no lane-aligned divisor -> whole-image
    # auto-pipelined path (T == 1), unaligned lane dim, padded C4/Cout matmuls.
    _run_case(1, k1, N=2, Cin=8, H=16, W=16, dim_size=4, Cout=5,
              max_rows_per_tile=512, tol=1e-2)
    # Case 2: larger channels, max_rows_per_tile=8 forces two haloed row-tiles per image
    # -> exercises the manual double-buffered DMA path (bf16 streaming, MXU everywhere).
    _run_case(2, k2, N=2, Cin=128, H=19, W=16, dim_size=4, Cout=6,
              max_rows_per_tile=8, tol=2.5e-2)
    print("KERNEL_OK")
</pallas_src>

<mosaic_0001>
module attributes {stable_mosaic.version = 11 : i64} {
  func.func @_fcn_head_kernel_block(%arg0: i32, %arg1: memref<1x8x256xbf16, #tpu.memory_space<vmem>>, %arg2: memref<4x8x8xbf16, #tpu.memory_space<vmem>>, %arg3: memref<8x1xf32, #tpu.memory_space<vmem>>, %arg4: memref<8x8xf32, #tpu.memory_space<vmem>>, %arg5: memref<1x5x208xf32, #tpu.memory_space<vmem>>) attributes {dimension_semantics = [#tpu.dimension_semantics<parallel>], iteration_bounds = array<i64: 2>, scalar_prefetch = 0 : i64, scratch_operands = 0 : i64, tpu.core_type = #tpu.core_type<tc>, window_params = [{transform_indices = @transform_0, window_bounds = array<i64: 1, 8, 256>}, {pipeline_mode = #tpu.pipeline_mode<synchronous>, transform_indices = @transform_1, window_bounds = array<i64: 4, 8, 8>}, {pipeline_mode = #tpu.pipeline_mode<synchronous>, transform_indices = @transform_2, window_bounds = array<i64: 8, 1>}, {pipeline_mode = #tpu.pipeline_mode<synchronous>, transform_indices = @transform_3, window_bounds = array<i64: 8, 8>}, {transform_indices = @transform_4, window_bounds = array<i64: 1, 5, 208>}]} {
    %c0 = arith.constant 0 : index
    %c0_0 = arith.constant 0 : index
    %c0_1 = arith.constant 0 : index
    %0 = vector.load %arg2[%c0, %c0_0, %c0_1] : memref<4x8x8xbf16, #tpu.memory_space<vmem>>, vector<1x8x8xbf16>
    %1 = vector.shape_cast %0 : vector<1x8x8xbf16> to vector<8x8xbf16>
    %c0_i32 = arith.constant 0 : i32
    %c0_i32_2 = arith.constant 0 : i32
    %c0_i32_3 = arith.constant 0 : i32
    %2 = tpu.memref_slice %arg1[%c0_i32, %c0_i32_2, %c0_i32_3] : memref<1x8x256xbf16, #tpu.memory_space<vmem>> -> memref<1x8x256xbf16, #tpu.memory_space<vmem>>
    %3 = tpu.memref_squeeze %2 : memref<1x8x256xbf16, #tpu.memory_space<vmem>> -> memref<8x256xbf16, #tpu.memory_space<vmem>>
    %c0_4 = arith.constant 0 : index
    %c0_5 = arith.constant 0 : index
    %4 = vector.load %3[%c0_4, %c0_5] : memref<8x256xbf16, #tpu.memory_space<vmem>>, vector<8x208xbf16>
    %cst = arith.constant dense<0.000000e+00> : vector<8x208xf32>
    %5 = tpu.matmul %1, %4, %cst {dimension_numbers = #tpu.dot_dimension_numbers<[1], [0], [0], [1], [0, 0, 1, 1], [], []>} : vector<8x8xbf16>, vector<8x208xbf16>, vector<8x208xf32> -> vector<8x208xf32>
    %c1 = arith.constant 1 : index
    %c0_6 = arith.constant 0 : index
    %c0_7 = arith.constant 0 : index
    %6 = vector.load %arg2[%c1, %c0_6, %c0_7] : memref<4x8x8xbf16, #tpu.memory_space<vmem>>, vector<1x8x8xbf16>
    %7 = vector.shape_cast %6 : vector<1x8x8xbf16> to vector<8x8xbf16>
    %c0_i32_8 = arith.constant 0 : i32
    %c0_i32_9 = arith.constant 0 : i32
    %c0_i32_10 = arith.constant 0 : i32
    %8 = tpu.memref_slice %arg1[%c0_i32_8, %c0_i32_9, %c0_i32_10] : memref<1x8x256xbf16, #tpu.memory_space<vmem>> -> memref<1x8x256xbf16, #tpu.memory_space<vmem>>
    %9 = tpu.memref_squeeze %8 : memref<1x8x256xbf16, #tpu.memory_space<vmem>> -> memref<8x256xbf16, #tpu.memory_space<vmem>>
    %c0_11 = arith.constant 0 : index
    %c16 = arith.constant 16 : index
    %10 = vector.load %9[%c0_11, %c16] : memref<8x256xbf16, #tpu.memory_space<vmem>>, vector<8x208xbf16>
    %cst_12 = arith.constant dense<0.000000e+00> : vector<8x208xf32>
    %11 = tpu.matmul %7, %10, %cst_12 {dimension_numbers = #tpu.dot_dimension_numbers<[1], [0], [0], [1], [0, 0, 1, 1], [], []>} : vector<8x8xbf16>, vector<8x208xbf16>, vector<8x208xf32> -> vector<8x208xf32>
    %12 = arith.addf %5, %11 : vector<8x208xf32>
    %c2 = arith.constant 2 : index
    %c0_13 = arith.constant 0 : index
    %c0_14 = arith.constant 0 : index
    %13 = vector.load %arg2[%c2, %c0_13, %c0_14] : memref<4x8x8xbf16, #tpu.memory_space<vmem>>, vector<1x8x8xbf16>
    %14 = vector.shape_cast %13 : vector<1x8x8xbf16> to vector<8x8xbf16>
    %c0_i32_15 = arith.constant 0 : i32
    %c0_i32_16 = arith.constant 0 : i32
    %c0_i32_17 = arith.constant 0 : i32
    %15 = tpu.memref_slice %arg1[%c0_i32_15, %c0_i32_16, %c0_i32_17] : memref<1x8x256xbf16, #tpu.memory_space<vmem>> -> memref<1x8x256xbf16, #tpu.memory_space<vmem>>
    %16 = tpu.memref_squeeze %15 : memref<1x8x256xbf16, #tpu.memory_space<vmem>> -> memref<8x256xbf16, #tpu.memory_space<vmem>>
    %c0_18 = arith.constant 0 : index
    %c32 = arith.constant 32 : index
    %17 = vector.load %16[%c0_18, %c32] : memref<8x256xbf16, #tpu.memory_space<vmem>>, vector<8x208xbf16>
    %cst_19 = arith.constant dense<0.000000e+00> : vector<8x208xf32>
    %18 = tpu.matmul %14, %17, %cst_19 {dimension_numbers = #tpu.dot_dimension_numbers<[1], [0], [0], [1], [0, 0, 1, 1], [], []>} : vector<8x8xbf16>, vector<8x208xbf16>, vector<8x208xf32> -> vector<8x208xf32>
    %19 = arith.addf %12, %18 : vector<8x208xf32>
    %c3 = arith.constant 3 : index
    %c0_20 = arith.constant 0 : index
    %c0_21 = arith.constant 0 : index
    %20 = vector.load %arg2[%c3, %c0_20, %c0_21] : memref<4x8x8xbf16, #tpu.memory_space<vmem>>, vector<1x8x8xbf16>
    %21 = vector.shape_cast %20 : vector<1x8x8xbf16> to vector<8x8xbf16>
    %c0_i32_22 = arith.constant 0 : i32
    %c0_i32_23 = arith.constant 0 : i32
    %c0_i32_24 = arith.constant 0 : i32
    %22 = tpu.memref_slice %arg1[%c0_i32_22, %c0_i32_23, %c0_i32_24] : memref<1x8x256xbf16, #tpu.memory_space<vmem>> -> memref<1x8x256xbf16, #tpu.memory_space<vmem>>
    %23 = tpu.memref_squeeze %22 : memref<1x8x256xbf16, #tpu.memory_space<vmem>> -> memref<8x256xbf16, #tpu.memory_space<vmem>>
    %c0_25 = arith.constant 0 : index
    %c48 = arith.constant 48 : index
    %24 = vector.load %23[%c0_25, %c48] : memref<8x256xbf16, #tpu.memory_space<vmem>>, vector<8x208xbf16>
    %cst_26 = arith.constant dense<0.000000e+00> : vector<8x208xf32>
    %25 = tpu.matmul %21, %24, %cst_26 {dimension_numbers = #tpu.dot_dimension_numbers<[1], [0], [0], [1], [0, 0, 1, 1], [], []>} : vector<8x8xbf16>, vector<8x208xbf16>, vector<8x208xf32> -> vector<8x208xf32>
    %26 = arith.addf %19, %25 : vector<8x208xf32>
    %c0_27 = arith.constant 0 : index
    %c0_28 = arith.constant 0 : index
    %27 = vector.load %arg3[%c0_27, %c0_28] : memref<8x1xf32, #tpu.memory_space<vmem>>, vector<8x1xf32>
    %28 = vector.broadcast %27 : vector<8x1xf32> to vector<8x208xf32>
    %29 = arith.addf %26, %28 : vector<8x208xf32>
    %cst_29 = arith.constant 0.000000e+00 : f32
    %30 = vector.broadcast %cst_29 : f32 to vector<8x208xf32>
    %31 = arith.maximumf %29, %30 : vector<8x208xf32>
    %c0_30 = arith.constant 0 : index
    %c0_31 = arith.constant 0 : index
    %32 = vector.load %arg4[%c0_30, %c0_31] : memref<8x8xf32, #tpu.memory_space<vmem>>, vector<8x8xf32>
    %cst_32 = arith.constant dense<0.000000e+00> : vector<8x208xf32>
    %33 = tpu.matmul %32, %31, %cst_32 {dimension_numbers = #tpu.dot_dimension_numbers<[1], [0], [0], [1], [0, 0, 1, 1], [], []>} : vector<8x8xf32>, vector<8x208xf32>, vector<8x208xf32> -> vector<8x208xf32>
    %34 = vector.extract_strided_slice %33 {offsets = [0, 0], sizes = [5, 208], strides = [1, 1]} : vector<8x208xf32> to vector<5x208xf32>
    %cst_33 = arith.constant dense<0xFF800000> : vector<208xf32>
    %35 = vector.multi_reduction <maximumf>, %34, %cst_33 [0] : vector<5x208xf32> to vector<208xf32>
    %36 = vector.shape_cast %35 : vector<208xf32> to vector<1x208xf32>
    %37 = vector.broadcast %36 : vector<1x208xf32> to vector<5x208xf32>
    %38 = arith.subf %34, %37 : vector<5x208xf32>
    %39 = math.exp %38 : vector<5x208xf32>
    %cst_34 = arith.constant dense<0.000000e+00> : vector<208xf32>
    %40 = vector.multi_reduction <add>, %39, %cst_34 [0] : vector<5x208xf32> to vector<208xf32>
    %41 = vector.shape_cast %40 : vector<208xf32> to vector<1x208xf32>
    %42 = tpu.reciprocal %41 {approx = true} : vector<1x208xf32> -> vector<1x208xf32>
    %43 = arith.mulf %41, %42 : vector<1x208xf32>
    %cst_35 = arith.constant 2.000000e+00 : f32
    %44 = vector.broadcast %cst_35 : f32 to vector<1x208xf32>
    %45 = arith.subf %44, %43 : vector<1x208xf32>
    %46 = arith.mulf %42, %45 : vector<1x208xf32>
    %47 = vector.broadcast %46 : vector<1x208xf32> to vector<5x208xf32>
    %48 = arith.mulf %39, %47 : vector<5x208xf32>
    %c0_36 = arith.constant 0 : index
    %c0_37 = arith.constant 0 : index
    %c0_38 = arith.constant 0 : index
    %49 = vector.load %arg5[%c0_36, %c0_37, %c0_38] : memref<1x5x208xf32, #tpu.memory_space<vmem>>, vector<1x5x208xf32>
    %50 = vector.shape_cast %49 : vector<1x5x208xf32> to vector<5x208xf32>
    %51 = vector.shape_cast %48 : vector<5x208xf32> to vector<1x5x208xf32>
    tpu.vector_store %arg5[%c0_36, %c0_37, %c0_38], %51 {strides = array<i32>} : memref<1x5x208xf32, #tpu.memory_space<vmem>>, vector<1x5x208xf32>,
    return
  }
  func.func @transform_0(%arg0: i32) -> (i32, i32, i32) {
    %c0_i32 = arith.constant 0 : i32
    %c0_i32_0 = arith.constant 0 : i32
    %c0_i32_1 = arith.constant 0 : i32
    return %arg0, %c0_i32, %c0_i32_0 : i32, i32, i32
  }
  func.func @transform_1(%arg0: i32) -> (i32, i32, i32) {
    %c0_i32 = arith.constant 0 : i32
    %c0_i32_0 = arith.constant 0 : i32
    %c0_i32_1 = arith.constant 0 : i32
    %c0_i32_2 = arith.constant 0 : i32
    return %c0_i32, %c0_i32_0, %c0_i32_1 : i32, i32, i32
  }
  func.func @transform_2(%arg0: i32) -> (i32, i32) {
    %c0_i32 = arith.constant 0 : i32
    %c0_i32_0 = arith.constant 0 : i32
    %c0_i32_1 = arith.constant 0 : i32
    return %c0_i32, %c0_i32_0 : i32, i32
  }
  func.func @transform_3(%arg0: i32) -> (i32, i32) {
    %c0_i32 = arith.constant 0 : i32
    %c0_i32_0 = arith.constant 0 : i32
    %c0_i32_1 = arith.constant 0 : i32
    return %c0_i32, %c0_i32_0 : i32, i32
  }
  func.func @transform_4(%arg0: i32) -> (i32, i32, i32) {
    %c0_i32 = arith.constant 0 : i32
    %c0_i32_0 = arith.constant 0 : i32
    %c0_i32_1 = arith.constant 0 : i32
    return %arg0, %c0_i32, %c0_i32_0 : i32, i32, i32
  }
}

</mosaic_0001>

<llo_original>
// kernel: tpu_custom_call.1
$region0: #{tpu_custom_call.1}
  #allocation0 [shape = 'u32[]', space=smem, size = 0x4, offset = 0x4, fixed_abs, tag = 'smem constant byte address 0x4 - core index']
  #allocation1 [shape = 'u32[144,128]{1,0:T(1,128)}', space=vmem, size = 0x12000, scoped, tag = 'internal scratch']
  %s0 = inlined_call_operand.hbm [shape: bf16[2,8,256], index: 0, kind: input, shape index: {}]
  %s1 = inlined_call_operand.hbm [shape: bf16[4,8,8], index: 1, kind: input, shape index: {}]
  %s2 = inlined_call_operand.vmem [shape: f32[8,1], index: 2, kind: input, shape index: {}]
  %s3 = inlined_call_operand.vmem [shape: f32[8,8], index: 3, kind: input, shape index: {}]
  %s4 = inlined_call_operand.vmem [shape: f32[2,5,208], index: 4, kind: output, shape index: {}]
  %s5 = sld [smem:[#allocation0]]
  $region57: #{tpu_custom_call.1} parent=0
    _
  %s7 = ssub.s32 1, %s5
  %s8 = scalar_select 0, %s7, %s5
  $region1: #{tpu_custom_call.1} parent=0
    #allocation2 [shape = 'u8[8192]{0}', space=vmem, size = 0x2000, scoped, tag = 'input window, operand 0']
    #allocation3 [shape = 's32[2]{0}', space=sflag, size = 0x8, scoped, tag = 'scoped memory for tpu_custom_call.1']
    #allocation4 [shape = 'u8[8192]{0}', space=vmem, size = 0x2000, scoped, tag = 'input window, operand 1, single buffered']
    #allocation5 [shape = 's32[1]{0}', space=sflag, size = 0x4, scoped, tag = 'scoped memory for tpu_custom_call.1']
    %9 = vsyncpa [#allocation3], 0
    %s10 = scalar_lea.sflag [#allocation3], 1
    %11 = vsyncpa %s10, 0
    %12 = vsyncpa [#allocation5], 0
    loop: start=0, step=1, limit=4
    $region2: #{tpu_custom_call.1} parent=1 // loop_pre_header
      _
    $region3: #{tpu_custom_call.1} parent=1 // loop_header
      %s14 = sphi 0, %s18
      %p15 = scmp.ge.s32.totalorder %s14, 4
      %s24 = sphi 0, %s26
      %s27 = sphi 0, %s24
      %s28 = sphi 0, %s27
      %s44 = sphi 0, %s28
      %s48 = sphi 0, %s48
      %s50 = sphi 0, %s48
      %s51 = sphi 0, %s50
      %s65 = sphi 0, %s51
      %s69 = sphi 0, %s69
      %s71 = sphi 0, %s69
      %s72 = sphi 0, %s71
      %s86 = sphi 0, %s72
      %s90 = sphi 0, %s90
      %s92 = sphi 0, %s90
      %s93 = sphi 0, %s92
      %s107 = sphi 0, %s93
      %s113 = sphi 0, %s115
      %s116 = sphi 0, %s113
      %s117 = sphi 0, %s116
      %s133 = sphi 0, %s117
    $region4: #{tpu_custom_call.1} parent=1 // loop_header_branch
      %17 = sbr.rel (%p15) target = $region8
    $region5: #{tpu_custom_call.1} parent=1 // loop_body
      %s19 = ssub.s32 %s14, 1
      %s20 = ssub.s32 %s14, 2
      %s21 = sadd.s32 %s14, 1
      %s22 = ssub.s32 %s14, %s21
      %p23 = scmp.eq.s32.totalorder %s22, 0
      %s25 = sadd.s32 %s24, 1
      %s26 = scalar_select %p23, %s24, %s25
      %p29 = pneg %p23
      %p30 = scmp.eq.s32.totalorder %s14, 1
      %p31 = por %p29, %p30
      %p32 = scmp.ne.s32.totalorder %s24, %s27
      %p33 = scmp.eq.s32.totalorder %s14, 0
      %p34 = por %p32, %p33
      %p35 = scmp.ne.s32.totalorder %s24, %s27
      %p36 = scmp.eq.s32.totalorder %s19, 1
      %p37 = por %p35, %p36
      %p38 = scmp.ne.s32.totalorder %s27, %s28
      %p39 = scmp.eq.s32.totalorder %s19, 0
      %p40 = por %p38, %p39
      %p41 = scmp.ne.s32.totalorder %s27, %s28
      %p42 = scmp.eq.s32.totalorder %s20, 1
      %p43 = por %p41, %p42
      %p45 = scmp.ne.s32.totalorder %s28, %s44
      %p46 = scmp.eq.s32.totalorder %s20, 0
      %p47 = por %p45, %p46
      %s49 = sadd.s32 %s48, 1
      %p52 = scmp.eq.s32.totalorder %s14, 1
      %p53 = scmp.ne.s32.totalorder %s48, %s50
      %p54 = scmp.eq.s32.totalorder %s14, 0
      %p55 = por %p53, %p54
      %p56 = scmp.ne.s32.totalorder %s48, %s50
      %p57 = scmp.eq.s32.totalorder %s19, 1
      %p58 = por %p56, %p57
      %p59 = scmp.ne.s32.totalorder %s50, %s51
      %p60 = scmp.eq.s32.totalorder %s19, 0
      %p61 = por %p59, %p60
      %p62 = scmp.ne.s32.totalorder %s50, %s51
      %p63 = scmp.eq.s32.totalorder %s20, 1
      %p64 = por %p62, %p63
      %p66 = scmp.ne.s32.totalorder %s51, %s65
      %p67 = scmp.eq.s32.totalorder %s20, 0
      %p68 = por %p66, %p67
      %s70 = sadd.s32 %s69, 1
      %p73 = scmp.eq.s32.totalorder %s14, 1
      %p74 = scmp.ne.s32.totalorder %s69, %s71
      %p75 = scmp.eq.s32.totalorder %s14, 0
      %p76 = por %p74, %p75
      %p77 = scmp.ne.s32.totalorder %s69, %s71
      %p78 = scmp.eq.s32.totalorder %s19, 1
      %p79 = por %p77, %p78
      %p80 = scmp.ne.s32.totalorder %s71, %s72
      %p81 = scmp.eq.s32.totalorder %s19, 0
      %p82 = por %p80, %p81
      %p83 = scmp.ne.s32.totalorder %s71, %s72
      %p84 = scmp.eq.s32.totalorder %s20, 1
      %p85 = por %p83, %p84
      %p87 = scmp.ne.s32.totalorder %s72, %s86
      %p88 = scmp.eq.s32.totalorder %s20, 0
      %p89 = por %p87, %p88
      %s91 = sadd.s32 %s90, 1
      %p94 = scmp.eq.s32.totalorder %s14, 1
      %p95 = scmp.ne.s32.totalorder %s90, %s92
      %p96 = scmp.eq.s32.totalorder %s14, 0
      %p97 = por %p95, %p96
      %p98 = scmp.ne.s32.totalorder %s90, %s92
      %p99 = scmp.eq.s32.totalorder %s19, 1
      %p100 = por %p98, %p99
      %p101 = scmp.ne.s32.totalorder %s92, %s93
      %p102 = scmp.eq.s32.totalorder %s19, 0
      %p103 = por %p101, %p102
      %p104 = scmp.ne.s32.totalorder %s92, %s93
      %p105 = scmp.eq.s32.totalorder %s20, 1
      %p106 = por %p104, %p105
      %p108 = scmp.ne.s32.totalorder %s93, %s107
      %p109 = scmp.eq.s32.totalorder %s20, 0
      %p110 = por %p108, %p109
      %s111 = ssub.s32 %s14, %s21
      %p112 = scmp.eq.s32.totalorder %s111, 0
      %s114 = sadd.s32 %s113, 1
      %s115 = scalar_select %p112, %s113, %s114
      %p118 = pneg %p112
      %p119 = scmp.eq.s32.totalorder %s14, 1
      %p120 = por %p118, %p119
      %p121 = scmp.ne.s32.totalorder %s113, %s116
      %p122 = scmp.eq.s32.totalorder %s14, 0
      %p123 = por %p121, %p122
      %p124 = scmp.ne.s32.totalorder %s113, %s116
      %p125 = scmp.eq.s32.totalorder %s19, 1
      %p126 = por %p124, %p125
      %p127 = scmp.ne.s32.totalorder %s116, %s117
      %p128 = scmp.eq.s32.totalorder %s19, 0
      %p129 = por %p127, %p128
      %p130 = scmp.ne.s32.totalorder %s116, %s117
      %p131 = scmp.eq.s32.totalorder %s20, 1
      %p132 = por %p130, %p131
      %p134 = scmp.ne.s32.totalorder %s117, %s133
      %p135 = scmp.eq.s32.totalorder %s20, 0
      %p136 = por %p134, %p135
      %p137 = scmp.le.s32.totalorder 1, %s14
      %p138 = scmp.lt.s32.totalorder %s14, 3
      %p139 = pnand %p137, %p138
      %p140 = pneg %p139
      // Predicated region
      $region9: #{tpu_custom_call.1} parent=5 // pred_check
        _
      $region10: #{tpu_custom_call.1} parent=5 // pred_check_branch
        %142 = sbr.rel (%p139) target = $region12
      $region11: #{tpu_custom_call.1} parent=5 // pred_region
        %s143 = ssub.s32 %s14, 1
        // Predicated region
        $region13: #{tpu_custom_call.1} parent=11 // pred_check
          %p144 = pneg %p61
        $region14: #{tpu_custom_call.1} parent=11 // pred_check_branch
          %146 = sbr.rel (%p144) target = $region16
        $region15: #{tpu_custom_call.1} parent=11 // pred_region
          %s148 = ssub.s32 256, 256
          %149 = vsyncadd [#allocation5], %s148
          %s150 = sshll.u32 [#allocation4], 4
          %s151 = int_to_ptr.vmem [resolvable:$true] %s150
          %156 = dma.hbm_to_vmem [thread:$0]  %s1, 256, %s151, [#allocation5], 64, 64, 4
        $region16: #{tpu_custom_call.1} parent=11 // pred_fallthru
          _
        // Predicated region
        $region17: #{tpu_custom_call.1} parent=11 // pred_check
          %p157 = pneg %p82
        $region18: #{tpu_custom_call.1} parent=11 // pred_check_branch
          %159 = sbr.rel (%p157) target = $region20
        $region19: #{tpu_custom_call.1} parent=11 // pred_region
          _
        $region20: #{tpu_custom_call.1} parent=11 // pred_fallthru
          _
        // Predicated region
        $region21: #{tpu_custom_call.1} parent=11 // pred_check
          %p160 = pneg %p103
        $region22: #{tpu_custom_call.1} parent=11 // pred_check_branch
          %162 = sbr.rel (%p160) target = $region24
        $region23: #{tpu_custom_call.1} parent=11 // pred_region
          _
        $region24: #{tpu_custom_call.1} parent=11 // pred_fallthru
          _
      $region12: #{tpu_custom_call.1} parent=5 // pred_fallthru
        _
      %p163 = scmp.lt.s32.totalorder %s14, 2
      // Predicated region
      $region25: #{tpu_custom_call.1} parent=5 // pred_check
        %p164 = pneg %p163
      $region26: #{tpu_custom_call.1} parent=5 // pred_check_branch
        %166 = sbr.rel (%p164) target = $region28
      $region27: #{tpu_custom_call.1} parent=5 // pred_region
        // Predicated region
        $region29: #{tpu_custom_call.1} parent=27 // pred_check
          %p167 = pneg %p34
        $region30: #{tpu_custom_call.1} parent=27 // pred_check_branch
          %169 = sbr.rel (%p167) target = $region32
        $region31: #{tpu_custom_call.1} parent=27 // pred_region
          %s170 = sand.u32 %s24, 1
          %s171 = scalar_lea.sflag [#allocation3], %s170
          %s172 = sand.u32 %s24, 1
          %s173 = smul.addr %s172, 8
          %s174 = scalar_lea.vmem [#allocation2], %s173
          %s176 = ssub.s32 128, 128
          %177 = vsyncadd %s171, %s176
          %s178 = smul.addr %s14, 2
          %s179 = smul.addr %s178, 64
          %s180 = scalar_lea.hbm %s0, %s179
          %s182 = sshll.u32 %s174, 4
          %s183 = int_to_ptr.vmem [resolvable:$true] %s182
          %185 = dma.hbm_to_vmem [thread:$0]  %s180, 128, %s183, %s171
        $region32: #{tpu_custom_call.1} parent=27 // pred_fallthru
          _
      $region28: #{tpu_custom_call.1} parent=5 // pred_fallthru
        _
      %p186 = scmp.le.s32.totalorder 1, %s14
      %p187 = scmp.lt.s32.totalorder %s14, 3
      %p188 = pnand %p186, %p187
      %p189 = pneg %p188
      // Predicated region
      $region33: #{tpu_custom_call.1} parent=5 // pred_check
        _
      $region34: #{tpu_custom_call.1} parent=5 // pred_check_branch
        %191 = sbr.rel (%p188) target = $region36
      $region35: #{tpu_custom_call.1} parent=5 // pred_region
        %s192 = ssub.s32 %s14, 1
        %s193 = sand.u32 %s27, 1
        %s194 = scalar_lea.sflag [#allocation3], %s193
        %s195 = sand.u32 %s27, 1
        %s196 = smul.addr %s195, 8
        %s197 = scalar_lea.vmem [#allocation2], %s196
        // Predicated region
        $region37: #{tpu_custom_call.1} parent=35 // pred_check
          %p198 = pneg %p40
        $region38: #{tpu_custom_call.1} parent=35 // pred_check_branch
          %200 = sbr.rel (%p198) target = $region40
        $region39: #{tpu_custom_call.1} parent=35 // pred_region
          %201 = dma.done %s194, 128
        $region40: #{tpu_custom_call.1} parent=35 // pred_fallthru
          _
        // Predicated region
        $region41: #{tpu_custom_call.1} parent=35 // pred_check
          %p202 = pneg %p61
        $region42: #{tpu_custom_call.1} parent=35 // pred_check_branch
          %204 = sbr.rel (%p202) target = $region44
        $region43: #{tpu_custom_call.1} parent=35 // pred_region
          %205 = dma.done [#allocation5], 256
        $region44: #{tpu_custom_call.1} parent=35 // pred_fallthru
          _
        %s206 = sand.u32 %s27, 1
        %s207 = scalar_lea.sflag [#allocation3], %s206
        %s208 = sand.u32 %s27, 1
        %s209 = smul.addr %s208, 8
        %s210 = scalar_lea.vmem [#allocation2], %s209
        %p211 = pneg %p40
        %p212 = pneg %p37
        %p213 = pneg %p61
        %p214 = pneg %p58
        %p215 = pneg %p82
        %p216 = pneg %p79
        %p217 = pneg %p103
        %p218 = pneg %p100
        %p219 = pneg %p129
        %p220 = pneg %p126
        %p221 = scmp.lt.s32.totalorder %s19, 1
        %s222 = scalar_select %p221, %s19, 1
        %s223 = smul.addr %s222, 2
        %s224 = smul.addr %s223, 8
        %s225 = scalar_lea.vmem %s4, %s224
        %p226 = scmp.lt.s32.totalorder %s19, 1
        %s227 = scalar_select %p226, %s19, 1
        %s228 = smul.addr %s227, 2
        %s229 = smul.addr %s228, 8
        %s230 = scalar_lea.vmem %s4, %s229
        %v232 = vld [vmem:[#allocation4] sm:$0xf]
        %v233 = vld [vmem:[%s197] sm:$0xff]
        %s234 = scalar_lea.vmem [#allocation4], 4
        %v235 = vld [vmem:[%s234] sm:$0xf]
        %v237 = vunpack.c.l.b16 %v233
        %v238 = vunpack.c.h.b16 %v233
        %v239 = vpack.c.b16 %v237, %v237
        %v240 = vpack.c.b16 %v238, %v238
        %241 = vrot.lane.b32.xlu0 %v239, 112
        %v242 = vpop.permute.xlu0 %241
        %243 = vrot.lane.b32.xlu0 %v240, 112
        %v244 = vpop.permute.xlu0 %243
        %vm245 = vcmask 916480
        %v246 = vsel %vm245, %v242, %v244
        %vm247 = vcmask 64512
        %v249 = vsel %vm247, %v235, 0
        %vm251 = vcmask 1043456
        %v253 = vsel %vm251, %v246, 0
        %v256 = vsel %vm251, %v244, 0
        %258 = vmatprep.subr.bf16.mxu0 0
        %259 = vmatpush1.bf16.msra.mxu0 0
        %260 = vmatprep.subr.bf16.mxu0 0
        %261 = vmatpush1.bf16.msra.mxu0 0
        %262 = vmatprep.subr.bf16.mxu0 0
        %263 = vmatpush1.bf16.msra.mxu0 0
        %264 = vmatprep.subr.bf16.mxu0 0
        %265 = vmatpush1.bf16.msra.mxu0 0
        %266 = vmatprep.subr.bf16.mxu0 0
        %267 = vmatpush1.bf16.msra.mxu0 0
        %268 = vmatprep.subr.bf16.mxu0 0
        %269 = vmatpush1.bf16.msra.mxu0 0
        %270 = vmatprep.subr.bf16.mxu0 0
        %271 = vmatpush1.bf16.msra.mxu0 0
        %272 = vmatprep.subr.bf16.mxu0 %v256
        %273 = vmatpush1.bf16.msra.mxu0 %v253
        %274 = vmatprep.subr.bf16.mxu0 0
        %275 = vmatpush2.bf16.msra.mxu0 0
        %276 = vmatprep.subr.bf16.mxu0 0
        %277 = vmatpush2.bf16.msra.mxu0 0
        %278 = vmatprep.subr.bf16.mxu0 0
        %279 = vmatpush2.bf16.msra.mxu0 0
        %280 = vmatprep.subr.bf16.mxu0 0
        %281 = vmatpush2.bf16.msra.mxu0 0
        %282 = vmatprep.subr.bf16.mxu0 0
        %283 = vmatpush2.bf16.msra.mxu0 0
        %284 = vmatprep.subr.bf16.mxu0 0
        %285 = vmatpush2.bf16.msra.mxu0 0
        %286 = vmatprep.subr.bf16.mxu0 0
        %287 = vmatpush2.bf16.msra.mxu0 0
        %288 = vmatprep.subr.bf16.mxu0 0
        %289 = vmatpush2.bf16.msra.mxu0 0
        %290 = vmatprep.mubr.bf16.mxu0 0
        %291 = vmatmul.mubr.bf16.gmra.mxu0 %v249
        %v292 = vpop.f32.mrf.mxu0
        %v293 = vadd.f32 0.0, %v292
        %v294 = vpop.f32.mrf.mxu0
        %v295 = vadd.f32 0.0, %v294
        %v296 = vpop.f32.mrf.mxu0
        %v297 = vpop.f32.mrf.mxu0
        %298 = vdwg.mxu0
        %v300 = vsel %vm247, %v232, 0
        %v303 = vsel %vm251, %v239, 0
        %v306 = vsel %vm251, %v240, 0
        %308 = vmatprep.subr.bf16.mxu0 0
        %309 = vmatpush1.bf16.msra.mxu0 0
        %310 = vmatprep.subr.bf16.mxu0 0
        %311 = vmatpush1.bf16.msra.mxu0 0
        %312 = vmatprep.subr.bf16.mxu0 0
        %313 = vmatpush1.bf16.msra.mxu0 0
        %314 = vmatprep.subr.bf16.mxu0 0
        %315 = vmatpush1.bf16.msra.mxu0 0
        %316 = vmatprep.subr.bf16.mxu0 0
        %317 = vmatpush1.bf16.msra.mxu0 0
        %318 = vmatprep.subr.bf16.mxu0 0
        %319 = vmatpush1.bf16.msra.mxu0 0
        %320 = vmatprep.subr.bf16.mxu0 0
        %321 = vmatpush1.bf16.msra.mxu0 0
        %322 = vmatprep.subr.bf16.mxu0 %v306
        %323 = vmatpush1.bf16.msra.mxu0 %v303
        %324 = vmatprep.subr.bf16.mxu0 0
        %325 = vmatpush2.bf16.msra.mxu0 0
        %326 = vmatprep.subr.bf16.mxu0 0
        %327 = vmatpush2.bf16.msra.mxu0 0
        %328 = vmatprep.subr.bf16.mxu0 0
        %329 = vmatpush2.bf16.msra.mxu0 0
        %330 = vmatprep.subr.bf16.mxu0 0
        %331 = vmatpush2.bf16.msra.mxu0 0
        %332 = vmatprep.subr.bf16.mxu0 0
        %333 = vmatpush2.bf16.msra.mxu0 0
        %334 = vmatprep.subr.bf16.mxu0 0
        %335 = vmatpush2.bf16.msra.mxu0 0
        %336 = vmatprep.subr.bf16.mxu0 0
        %337 = vmatpush2.bf16.msra.mxu0 0
        %338 = vmatprep.subr.bf16.mxu0 0
        %339 = vmatpush2.bf16.msra.mxu0 0
        %340 = vmatprep.mubr.bf16.mxu0 0
        %341 = vmatmul.mubr.bf16.gmra.mxu0 %v300
        %v342 = vpop.f32.mrf.mxu0
        %v343 = vadd.f32 %v293, %v342
        %v344 = vpop.f32.mrf.mxu0
        %v345 = vadd.f32 %v295, %v344
        %v346 = vpop.f32.mrf.mxu0
        %v347 = vpop.f32.mrf.mxu0
        %348 = vdwg.mxu0
        %s349 = scalar_lea.vmem [#allocation4], 8
        %v350 = vld [vmem:[%s349] sm:$0xf]
        %351 = vrot.lane.b32.xlu0 %v239, 96
        %v352 = vpop.permute.xlu0 %351
        %353 = vrot.lane.b32.xlu0 %v240, 96
        %v354 = vpop.permute.xlu0 %353
        %vm355 = vcmask 785408
        %v356 = vsel %vm355, %v352, %v354
        %v358 = vsel %vm247, %v350, 0
        %v361 = vsel %vm251, %v356, 0
        %v364 = vsel %vm251, %v354, 0
        %366 = vmatprep.subr.bf16.mxu0 0
        %367 = vmatpush1.bf16.msra.mxu0 0
        %368 = vmatprep.subr.bf16.mxu0 0
        %369 = vmatpush1.bf16.msra.mxu0 0
        %370 = vmatprep.subr.bf16.mxu0 0
        %371 = vmatpush1.bf16.msra.mxu0 0
        %372 = vmatprep.subr.bf16.mxu0 0
        %373 = vmatpush1.bf16.msra.mxu0 0
        %374 = vmatprep.subr.bf16.mxu0 0
        %375 = vmatpush1.bf16.msra.mxu0 0
        %376 = vmatprep.subr.bf16.mxu0 0
        %377 = vmatpush1.bf16.msra.mxu0 0
        %378 = vmatprep.subr.bf16.mxu0 0
        %379 = vmatpush1.bf16.msra.mxu0 0
        %380 = vmatprep.subr.bf16.mxu0 %v364
        %381 = vmatpush1.bf16.msra.mxu0 %v361
        %382 = vmatprep.subr.bf16.mxu0 0
        %383 = vmatpush2.bf16.msra.mxu0 0
        %384 = vmatprep.subr.bf16.mxu0 0
        %385 = vmatpush2.bf16.msra.mxu0 0
        %386 = vmatprep.subr.bf16.mxu0 0
        %387 = vmatpush2.bf16.msra.mxu0 0
        %388 = vmatprep.subr.bf16.mxu0 0
        %389 = vmatpush2.bf16.msra.mxu0 0
        %390 = vmatprep.subr.bf16.mxu0 0
        %391 = vmatpush2.bf16.msra.mxu0 0
        %392 = vmatprep.subr.bf16.mxu0 0
        %393 = vmatpush2.bf16.msra.mxu0 0
        %394 = vmatprep.subr.bf16.mxu0 0
        %395 = vmatpush2.bf16.msra.mxu0 0
        %396 = vmatprep.subr.bf16.mxu0 0
        %397 = vmatpush2.bf16.msra.mxu0 0
        %398 = vmatprep.mubr.bf16.mxu0 0
        %399 = vmatmul.mubr.bf16.gmra.mxu0 %v358
        %v400 = vpop.f32.mrf.mxu0
        %v401 = vadd.f32 0.0, %v400
        %v402 = vpop.f32.mrf.mxu0
        %v403 = vadd.f32 0.0, %v402
        %v404 = vpop.f32.mrf.mxu0
        %v405 = vpop.f32.mrf.mxu0
        %406 = vdwg.mxu0
        %v407 = vadd.f32 %v343, %v401
        %v408 = vadd.f32 %v345, %v403
        %s409 = scalar_lea.vmem [#allocation4], 12
        %v410 = vld [vmem:[%s409] sm:$0xf]
        %411 = vrot.lane.b32.xlu0 %v239, 80
        %v412 = vpop.permute.xlu0 %411
        %413 = vrot.lane.b32.xlu0 %v240, 80
        %v414 = vpop.permute.xlu0 %413
        %vm415 = vcmask 654336
        %v416 = vsel %vm415, %v412, %v414
        %v418 = vsel %vm247, %v410, 0
        %v421 = vsel %vm251, %v416, 0
        %v424 = vsel %vm251, %v414, 0
        %426 = vmatprep.subr.bf16.mxu0 0
        %427 = vmatpush1.bf16.msra.mxu0 0
        %428 = vmatprep.subr.bf16.mxu0 0
        %429 = vmatpush1.bf16.msra.mxu0 0
        %430 = vmatprep.subr.bf16.mxu0 0
        %431 = vmatpush1.bf16.msra.mxu0 0
        %432 = vmatprep.subr.bf16.mxu0 0
        %433 = vmatpush1.bf16.msra.mxu0 0
        %434 = vmatprep.subr.bf16.mxu0 0
        %435 = vmatpush1.bf16.msra.mxu0 0
        %436 = vmatprep.subr.bf16.mxu0 0
        %437 = vmatpush1.bf16.msra.mxu0 0
        %438 = vmatprep.subr.bf16.mxu0 0
        %439 = vmatpush1.bf16.msra.mxu0 0
        %440 = vmatprep.subr.bf16.mxu0 %v424
        %441 = vmatpush1.bf16.msra.mxu0 %v421
        %442 = vmatprep.subr.bf16.mxu0 0
        %443 = vmatpush2.bf16.msra.mxu0 0
        %444 = vmatprep.subr.bf16.mxu0 0
        %445 = vmatpush2.bf16.msra.mxu0 0
        %446 = vmatprep.subr.bf16.mxu0 0
        %447 = vmatpush2.bf16.msra.mxu0 0
        %448 = vmatprep.subr.bf16.mxu0 0
        %449 = vmatpush2.bf16.msra.mxu0 0
        %450 = vmatprep.subr.bf16.mxu0 0
        %451 = vmatpush2.bf16.msra.mxu0 0
        %452 = vmatprep.subr.bf16.mxu0 0
        %453 = vmatpush2.bf16.msra.mxu0 0
        %454 = vmatprep.subr.bf16.mxu0 0
        %455 = vmatpush2.bf16.msra.mxu0 0
        %456 = vmatprep.subr.bf16.mxu0 0
        %457 = vmatpush2.bf16.msra.mxu0 0
        %458 = vmatprep.mubr.bf16.mxu0 0
        %459 = vmatmul.mubr.bf16.gmra.mxu0 %v418
        %v460 = vpop.f32.mrf.mxu0
        %v461 = vadd.f32 0.0, %v460
        %v462 = vpop.f32.mrf.mxu0
        %v463 = vadd.f32 0.0, %v462
        %v464 = vpop.f32.mrf.mxu0
        %v465 = vpop.f32.mrf.mxu0
        %466 = vdwg.mxu0
        %v467 = vadd.f32 %v407, %v461
        %v468 = vadd.f32 %v408, %v463
        %v469 = vld [vmem:[%s2] sm:$0xff]
        %471 = vset.pattern.permute.xlu0 0
        %472 = vperm.xlu0 %471, %v469
        %v473 = vpop.permute.xlu0 %472
        %v475 = vadd.f32 %v467, %v473
        %v476 = vadd.f32 %v468, %v473
        %v477 = vmax.f32 %v475, 0.0
        %v478 = vmax.f32 %v476, 0.0
        %v479 = vld [vmem:[%s3] sm:$0xff]
        %v481 = vsel %vm247, %v479, 0
        %483 = vmatprep.subr.mxu0 0.0
        %484 = vmatpush1.msra.mxu0 0.0
        %485 = vmatprep.subr.mxu0 0.0
        %486 = vmatpush1.msra.mxu0 0.0
        %487 = vmatprep.subr.mxu0 0.0
        %488 = vmatpush1.msra.mxu0 0.0
        %489 = vmatprep.subr.mxu0 0.0
        %490 = vmatpush1.msra.mxu0 0.0
        %491 = vmatprep.subr.mxu0 0.0
        %492 = vmatpush1.msra.mxu0 0.0
        %493 = vmatprep.subr.mxu0 0.0
        %494 = vmatpush1.msra.mxu0 0.0
        %495 = vmatprep.subr.mxu0 0.0
        %496 = vmatpush1.msra.mxu0 0.0
        %497 = vmatprep.subr.mxu0 0.0
        %498 = vmatpush1.msra.mxu0 0.0
        %499 = vmatprep.subr.mxu0 0.0
        %500 = vmatpush1.msra.mxu0 0.0
        %501 = vmatprep.subr.mxu0 0.0
        %502 = vmatpush1.msra.mxu0 0.0
        %503 = vmatprep.subr.mxu0 0.0
        %504 = vmatpush1.msra.mxu0 0.0
        %505 = vmatprep.subr.mxu0 0.0
        %506 = vmatpush1.msra.mxu0 0.0
        %507 = vmatprep.subr.mxu0 0.0
        %508 = vmatpush1.msra.mxu0 0.0
        %509 = vmatprep.subr.mxu0 0.0
        %510 = vmatpush1.msra.mxu0 0.0
        %511 = vmatprep.subr.mxu0 0.0
        %512 = vmatpush1.msra.mxu0 0.0
        %513 = vmatprep.subr.mxu0 %v478
        %514 = vmatpush1.msra.mxu0 %v477
        %515 = vmatprep.subr.mxu0 0.0
        %516 = vmatpush2.msra.mxu0 0.0
        %517 = vmatprep.subr.mxu0 0.0
        %518 = vmatpush2.msra.mxu0 0.0
        %519 = vmatprep.subr.mxu0 0.0
        %520 = vmatpush2.msra.mxu0 0.0
        %521 = vmatprep.subr.mxu0 0.0
        %522 = vmatpush2.msra.mxu0 0.0
        %523 = vmatprep.subr.mxu0 0.0
        %524 = vmatpush2.msra.mxu0 0.0
        %525 = vmatprep.subr.mxu0 0.0
        %526 = vmatpush2.msra.mxu0 0.0
        %527 = vmatprep.subr.mxu0 0.0
        %528 = vmatpush2.msra.mxu0 0.0
        %529 = vmatprep.subr.mxu0 0.0
        %530 = vmatpush2.msra.mxu0 0.0
        %531 = vmatprep.subr.mxu0 0.0
        %532 = vmatpush2.msra.mxu0 0.0
        %533 = vmatprep.subr.mxu0 0.0
        %534 = vmatpush2.msra.mxu0 0.0
        %535 = vmatprep.subr.mxu0 0.0
        %536 = vmatpush2.msra.mxu0 0.0
        %537 = vmatprep.subr.mxu0 0.0
        %538 = vmatpush2.msra.mxu0 0.0
        %539 = vmatprep.subr.mxu0 0.0
        %540 = vmatpush2.msra.mxu0 0.0
        %541 = vmatprep.subr.mxu0 0.0
        %542 = vmatpush2.msra.mxu0 0.0
        %543 = vmatprep.subr.mxu0 0.0
        %544 = vmatpush2.msra.mxu0 0.0
        %545 = vmatprep.subr.mxu0 0.0
        %546 = vmatpush2.msra.mxu0 0.0
        %547 = vmatprep.mubr.f32.mxu0 0.0
        %548 = vmatmul.mubr.f32.gmra.mxu0 %v481
        %v549 = vpop.f32.mrf.mxu0
        %v550 = vadd.f32 0.0, %v549
        %v551 = vpop.f32.mrf.mxu0
        %v552 = vadd.f32 0.0, %v551
        %553 = vdwg.mxu0
        %vm554 = vcmask 1044480
        %v555 = vsel %vm554, %v550, -inf
        %v556 = vrot.slane %v555, 4
        %v557 = vmax.f32 %v555, %v556
        %v558 = vrot.slane %v557, 2
        %v559 = vmax.f32 %v557, %v558
        %v560 = vrot.slane %v559, 1
        %v561 = vmax.f32 %v559, %v560
        %vm562 = vcmask 651264
        %v563 = vsel %vm562, %v552, -inf
        %v564 = vrot.slane %v563, 4
        %v565 = vmax.f32 %v563, %v564
        %v566 = vrot.slane %v565, 2
        %v567 = vmax.f32 %v565, %v566
        %v568 = vrot.slane %v567, 1
        %v569 = vmax.f32 %v567, %v568
        %v570 = vsub.f32 %v550, %v561
        %v571 = vsub.f32 %v552, %v569
        %v572 = vmul.f32 %v570, 1.442695
        %v573 = vpow.pop %v572
        %v574 = vmul.f32 %v571, 1.442695
        %v575 = vpow.pop %v574
        %v576 = vsel %vm554, %v573, 0.0
        %v577 = vrot.slane %v576, 4
        %v578 = vadd.f32 %v576, %v577
        %v579 = vrot.slane %v578, 2
        %v580 = vadd.f32 %v578, %v579
        %v581 = vrot.slane %v580, 1
        %v582 = vadd.f32 %v580, %v581
        %v583 = vsel %vm562, %v575, 0.0
        %v584 = vrot.slane %v583, 4
        %v585 = vadd.f32 %v583, %v584
        %v586 = vrot.slane %v585, 2
        %v587 = vadd.f32 %v585, %v586
        %v588 = vrot.slane %v587, 1
        %v589 = vadd.f32 %v587, %v588
        %v590 = vrcp.pop %v582
        %v591 = vrcp.pop %v589
        %v592 = vmul.f32 %v582, %v590
        %v593 = vmul.f32 %v589, %v591
        %v594 = vsub.f32 2.0, %v592
        %v595 = vsub.f32 2.0, %v593
        %v596 = vmul.f32 %v590, %v594
        %v597 = vmul.f32 %v591, %v595
        %v598 = vmul.f32 %v573, %v596
        %v599 = vmul.f32 %v575, %v597
        %600 = vst [vmem:[%s230] sm:$0x1f] %v598
        %601 = vst.msk [vmem:[%s230 + $0x8] sm:$0x1f] %vm562, %v599
        %p602 = scmp.lt.s32.totalorder %s19, 1
        %s603 = scalar_select %p602, %s19, 1
        %s604 = smul.addr %s603, 2
        %s605 = smul.addr %s604, 8
        %s606 = scalar_lea.vmem %s4, %s605
        // Predicated region
        $region45: #{tpu_custom_call.1} parent=35 // pred_check
          %p607 = pneg %p126
        $region46: #{tpu_custom_call.1} parent=35 // pred_check_branch
          %609 = sbr.rel (%p607) target = $region48
        $region47: #{tpu_custom_call.1} parent=35 // pred_region
          _
        $region48: #{tpu_custom_call.1} parent=35 // pred_fallthru
          _
      $region36: #{tpu_custom_call.1} parent=5 // pred_fallthru
        _
      %p610 = scmp.le.s32.totalorder 2, %s14
      // Predicated region
      $region49: #{tpu_custom_call.1} parent=5 // pred_check
        %p611 = pneg %p610
      $region50: #{tpu_custom_call.1} parent=5 // pred_check_branch
        %613 = sbr.rel (%p611) target = $region52
      $region51: #{tpu_custom_call.1} parent=5 // pred_region
        %s614 = ssub.s32 %s14, 2
        // Predicated region
        $region53: #{tpu_custom_call.1} parent=51 // pred_check
          %p615 = pneg %p132
        $region54: #{tpu_custom_call.1} parent=51 // pred_check_branch
          %617 = sbr.rel (%p615) target = $region56
        $region55: #{tpu_custom_call.1} parent=51 // pred_region
          %p618 = scmp.lt.s32.totalorder %s20, 1
          %s619 = scalar_select %p618, %s20, 1
          %s620 = smul.addr %s619, 2
          %s621 = smul.addr %s620, 8
          %s622 = scalar_lea.vmem %s4, %s621
        $region56: #{tpu_custom_call.1} parent=51 // pred_fallthru
          _
      $region52: #{tpu_custom_call.1} parent=5 // pred_fallthru
        _
    $region6: #{tpu_custom_call.1} parent=1 // loop_footer
      %s18 = sadd.s32 1, %s14
    $region7: #{tpu_custom_call.1} parent=1 // loop_footer_branch
      %13 = sbr.rel target = $region3
    $region8: #{tpu_custom_call.1} parent=1 // loop_exit
      _
    %623 = vsyncpa [#allocation3], 1
    %s624 = scalar_lea.sflag [#allocation3], 1
    %625 = vsyncpa %s624, 1
    %626 = vsyncpa [#allocation5], 1

</llo_original>
